<compile_context>
chip_gen: v7x
topology: tpu7x:2x2x1
jax: 0.10.0
libtpu: 0.0.40
codegen_flags: <defaults>
</compile_context>

<pallas_src>
import functools

import jax
import jax.numpy as jnp
from jax import lax
from jax.experimental import pallas as pl
from jax.experimental.pallas import tpu as pltpu


def _round_up(n, m):
    return (n + m - 1) // m * m


# ----------------------------- Pallas kernel -------------------------------

def _policy_kernel(n_ref, x_obs_ref, act_emb_ref, params_ref, o_ref,
                   *, d_in, emb_dim, hidden, a_pad, offsets):
    """Fused policy_net.forward hot path.

    obs branch : [1, d_in]   -> obs_f1 -> relu -> obs_f2   -> [1, H]
    act branch : [A_pad,emb] -> act_f1 -> relu -> act_f2   -> [A_pad, H]
    logits     : obs_h . act_h^T  (lane-dense [1, A_pad], MXU)
    output     : masked, numerically-stable softmax over the lane axis.
    """
    (ow1, ob1), (ow2, ob2), (aw1, ab1), (aw2, ab2) = offsets
    f32 = jnp.float32

    # ---- observation branch (single row) ----
    x = x_obs_ref[...].astype(f32)                                   # [1, d_in]
    w = params_ref[ow1:ow1 + d_in, :]
    b = params_ref[ob1:ob1 + 1, :]
    h = jnp.maximum(jnp.dot(x, w, preferred_element_type=f32) + b, 0.0)
    w = params_ref[ow2:ow2 + hidden, :]
    b = params_ref[ob2:ob2 + 1, :]
    obs_h = jnp.dot(h, w, preferred_element_type=f32) + b            # [1, H] (no relu)

    # ---- action branch (all legal actions at once, sublane-packed) ----
    a = act_emb_ref[...].astype(f32)                                 # [A_pad, emb]
    w = params_ref[aw1:aw1 + emb_dim, :]
    b = params_ref[ab1:ab1 + 1, :]
    ah = jnp.maximum(jnp.dot(a, w, preferred_element_type=f32) + b, 0.0)
    w = params_ref[aw2:aw2 + hidden, :]
    b = params_ref[ab2:ab2 + 1, :]
    act_h = jnp.dot(ah, w, preferred_element_type=f32) + b           # [A_pad, H] (no relu)

    # ---- logits = <act_h, obs_h>, laid out lane-dense as [1, A_pad] ----
    logits = lax.dot_general(obs_h, act_h, (((1,), (1,)), ((), ())),
                             preferred_element_type=f32)             # [1, A_pad]

    # ---- masked softmax over the valid actions (stable: max-subtraction) ----
    n_valid = n_ref[0]
    lane = lax.broadcasted_iota(jnp.int32, (1, a_pad), 1)
    valid = lane < n_valid
    logits = jnp.where(valid, logits, jnp.float32(-1e30))
    m = jnp.max(logits, axis=-1, keepdims=True)
    p = jnp.exp(logits - m)
    p = jnp.where(valid, p, 0.0)
    o_ref[...] = p / jnp.sum(p, axis=-1, keepdims=True)


# ------------------------------- wrappers -----------------------------------

def make_policy_forward(*, num_defender, time_horizon, embedding_dim,
                        hidden_dim, a_pad, param_offsets):
    d_in = (num_defender + 1) * embedding_dim + time_horizon + 1

    kernel = functools.partial(
        _policy_kernel, d_in=d_in, emb_dim=embedding_dim, hidden=hidden_dim,
        a_pad=a_pad, offsets=param_offsets)

    vmem = pl.BlockSpec(memory_space=pltpu.MemorySpace.VMEM)
    smem = pl.BlockSpec(memory_space=pltpu.MemorySpace.SMEM)

    # Gridless: each operand is a single full block; 4 inputs total
    # (scalar count + obs features + action embeddings + packed params).
    pallas_fn = pl.pallas_call(
        kernel,
        out_shape=jax.ShapeDtypeStruct((1, a_pad), jnp.float32),
        in_specs=[smem, vmem, vmem, vmem],
        out_specs=vmem,
    )

    @jax.jit
    def forward(node_idx, t, legal_act_pad, n_legal, obsn_emb, actn_emb,
                packed_params):
        """node_idx:      [num_defender+1] int32 (defender positions + attacker pos)
           t:             scalar int32      (len(attacker_his) - 1)
           legal_act_pad: [a_pad] int32     (zero-padded beyond n_legal)
           n_legal:       [1] int32
        Returns padded probabilities of shape [1, a_pad]; entries >= n_legal are 0.
        """
        x_emb = obsn_emb[node_idx].reshape(1, -1)                    # [1, (nd+1)*E]
        t_oh = jax.nn.one_hot(t, time_horizon + 1, dtype=jnp.float32)[None, :]
        x_obs = jnp.concatenate([x_emb, t_oh], axis=-1)              # [1, d_in]
        act_emb = actn_emb[legal_act_pad]                            # [a_pad, E]
        return pallas_fn(n_legal, x_obs, act_emb, packed_params)

    return forward


def pack_linear_params(linears, hidden_dim):
    """Pack all (W, b) pairs into one [R, hidden] f32 slab.

    Each section is padded to a multiple of 8 sublanes so every in-kernel
    static slice starts on a tile boundary.  Returns (slab, offsets) where
    offsets[i] = (w_row_offset, b_row_offset).
    """
    segs, offsets, off = [], [], 0
    for w, b in linears:
        fan_in = w.shape[0]
        fan_pad = _round_up(fan_in, 8)
        wp = jnp.zeros((fan_pad, hidden_dim), jnp.float32).at[:fan_in, :].set(w)
        bp = jnp.zeros((8, hidden_dim), jnp.float32).at[0, :].set(b)
        segs.extend([wp, bp])
        offsets.append((off, off + fan_pad))
        off += fan_pad + 8
    return jnp.concatenate(segs, axis=0), tuple(offsets)


def init_params(key, num_nodes, time_horizon, num_defender,
                embedding_dim, hidden_dim):
    """policy_net.init_weights(): every parameter ~ Normal(0, 0.1)."""
    ks = jax.random.split(key, 10)
    d_in = (num_defender + 1) * embedding_dim + time_horizon + 1

    def normal(k, shape):
        return 0.1 * jax.random.normal(k, shape, jnp.float32)

    obsn_emb = normal(ks[0], (num_nodes + 1, embedding_dim)).at[0].set(0.0)
    actn_emb = normal(ks[1], (num_nodes + 1, embedding_dim)).at[0].set(0.0)
    obs_w1, obs_b1 = normal(ks[2], (d_in, hidden_dim)), normal(ks[3], (hidden_dim,))
    obs_w2, obs_b2 = normal(ks[4], (hidden_dim, hidden_dim)), normal(ks[5], (hidden_dim,))
    act_w1, act_b1 = normal(ks[6], (embedding_dim, hidden_dim)), normal(ks[7], (hidden_dim,))
    act_w2, act_b2 = normal(ks[8], (hidden_dim, hidden_dim)), normal(ks[9], (hidden_dim,))
    linears = ((obs_w1, obs_b1), (obs_w2, obs_b2),
               (act_w1, act_b1), (act_w2, act_b2))
    return obsn_emb, actn_emb, linears


def policy_forward_ref(attacker_his, defender_position, legal_act,
                       obsn_emb, actn_emb, linears, time_horizon):
    """Pure-JAX replica of policy_net.forward for correctness checking."""
    (ow1, ob1), (ow2, ob2), (aw1, ab1), (aw2, ab2) = linears
    idx = jnp.array(list(defender_position) + [attacker_his[-1]], jnp.int32)
    x = jnp.concatenate([
        obsn_emb[idx].reshape(-1),
        jax.nn.one_hot(len(attacker_his) - 1, time_horizon + 1,
                       dtype=jnp.float32)])
    obs = jnp.maximum(x @ ow1 + ob1, 0.0)
    obs = obs @ ow2 + ob2                                  # obs_f2, no relu
    act = actn_emb[jnp.array(legal_act, jnp.int32)]        # [A, E]
    act = jnp.maximum(act @ aw1 + ab1, 0.0)
    act = act @ aw2 + ab2                                  # act_f2, no relu
    logits = act @ obs                                     # [A]
    return jax.nn.softmax(logits, axis=-1)


# --------------------------------- main --------------------------------------

if __name__ == "__main__":
    # Small synthetic game / args.
    num_nodes = 12
    time_horizon = 7        # -> one-hot of size 8
    num_defender = 3
    embedding_dim = 8       # args.embedding_dim
    hidden_dim = 32         # args.hidden_dim
    a_pad = 128             # lane-dense padded action axis (= output lane dim)
    # D_in = (3 + 1) * 8 + 7 + 1 = 40

    key = jax.random.PRNGKey(0)
    pkey, okey = jax.random.split(key)
    obsn_emb, actn_emb, linears = init_params(
        pkey, num_nodes, time_horizon, num_defender, embedding_dim, hidden_dim)
    packed_params, offsets = pack_linear_params(linears, hidden_dim)

    forward = make_policy_forward(
        num_defender=num_defender, time_horizon=time_horizon,
        embedding_dim=embedding_dim, hidden_dim=hidden_dim,
        a_pad=a_pad, param_offsets=offsets)

    # Deterministic example observation / legal actions (node ids 1..num_nodes).
    k1, k2 = jax.random.split(okey)
    attacker_his = [int(v) for v in
                    jax.random.randint(k1, (4,), 1, num_nodes + 1)]
    defender_position = tuple(int(v) for v in
                              jax.random.randint(k2, (num_defender,), 1,
                                                 num_nodes + 1))
    legal_act = [1, 3, 5, 7, 9, 11, 2]            # attacker's legal next nodes
    n_legal = len(legal_act)

    # Traced (non-retracing) inputs for the jitted forward.
    node_idx = jnp.array(list(defender_position) + [attacker_his[-1]], jnp.int32)
    t = jnp.int32(len(attacker_his) - 1)
    legal_act_pad = jnp.zeros((a_pad,), jnp.int32).at[:n_legal].set(
        jnp.array(legal_act, jnp.int32))
    n_legal_arr = jnp.array([n_legal], jnp.int32)

    probs_pad = forward(node_idx, t, legal_act_pad, n_legal_arr,
                        obsn_emb, actn_emb, packed_params)
    probs_pad = jax.block_until_ready(probs_pad)
    probs = probs_pad[0, :n_legal]

    ref = policy_forward_ref(attacker_his, defender_position, legal_act,
                             obsn_emb, actn_emb, linears, time_horizon)

    assert probs_pad.shape == (1, a_pad)
    assert jnp.allclose(probs, ref, atol=2e-5, rtol=1e-4), (probs, ref)
    assert abs(float(jnp.sum(probs)) - 1.0) < 1e-5
    assert float(jnp.max(jnp.abs(probs_pad[0, n_legal:]))) == 0.0

    print("KERNEL_OK")
</pallas_src>

<mosaic_0001>
module attributes {stable_mosaic.version = 11 : i64} {
  func.func @_policy_kernel(%arg0: memref<1xi32, #tpu.memory_space<smem>>, %arg1: memref<1x40xf32, #tpu.memory_space<vmem>>, %arg2: memref<128x8xf32, #tpu.memory_space<vmem>>, %arg3: memref<144x32xf32, #tpu.memory_space<vmem>>, %arg4: memref<1x128xf32, #tpu.memory_space<vmem>>) attributes {dimension_semantics = [], scalar_prefetch = 0 : i64, scratch_operands = 0 : i64, tpu.core_type = #tpu.core_type<tc>} {
    %c0 = arith.constant 0 : index
    %c0_0 = arith.constant 0 : index
    %0 = vector.load %arg1[%c0, %c0_0] : memref<1x40xf32, #tpu.memory_space<vmem>>, vector<1x40xf32>
    %c0_1 = arith.constant 0 : index
    %c0_2 = arith.constant 0 : index
    %1 = vector.load %arg3[%c0_1, %c0_2] : memref<144x32xf32, #tpu.memory_space<vmem>>, vector<40x32xf32>
    %c40 = arith.constant 40 : index
    %c0_3 = arith.constant 0 : index
    %2 = vector.load %arg3[%c40, %c0_3] : memref<144x32xf32, #tpu.memory_space<vmem>>, vector<1x32xf32>
    %cst = arith.constant dense<0.000000e+00> : vector<1x32xf32>
    %3 = tpu.matmul %0, %1, %cst {dimension_numbers = #tpu.dot_dimension_numbers<[1], [0], [0], [1], [0, 0, 1, 1], [], []>} : vector<1x40xf32>, vector<40x32xf32>, vector<1x32xf32> -> vector<1x32xf32>
    %4 = arith.addf %3, %2 : vector<1x32xf32>
    %cst_4 = arith.constant 0.000000e+00 : f32
    %5 = vector.broadcast %cst_4 : f32 to vector<1x32xf32>
    %6 = arith.maximumf %4, %5 : vector<1x32xf32>
    %c48 = arith.constant 48 : index
    %c0_5 = arith.constant 0 : index
    %7 = vector.load %arg3[%c48, %c0_5] : memref<144x32xf32, #tpu.memory_space<vmem>>, vector<32x32xf32>
    %c80 = arith.constant 80 : index
    %c0_6 = arith.constant 0 : index
    %8 = vector.load %arg3[%c80, %c0_6] : memref<144x32xf32, #tpu.memory_space<vmem>>, vector<1x32xf32>
    %cst_7 = arith.constant dense<0.000000e+00> : vector<1x32xf32>
    %9 = tpu.matmul %6, %7, %cst_7 {dimension_numbers = #tpu.dot_dimension_numbers<[1], [0], [0], [1], [0, 0, 1, 1], [], []>} : vector<1x32xf32>, vector<32x32xf32>, vector<1x32xf32> -> vector<1x32xf32>
    %10 = arith.addf %9, %8 : vector<1x32xf32>
    %c0_8 = arith.constant 0 : index
    %c0_9 = arith.constant 0 : index
    %11 = vector.load %arg2[%c0_8, %c0_9] : memref<128x8xf32, #tpu.memory_space<vmem>>, vector<128x8xf32>
    %c88 = arith.constant 88 : index
    %c0_10 = arith.constant 0 : index
    %12 = vector.load %arg3[%c88, %c0_10] : memref<144x32xf32, #tpu.memory_space<vmem>>, vector<8x32xf32>
    %c96 = arith.constant 96 : index
    %c0_11 = arith.constant 0 : index
    %13 = vector.load %arg3[%c96, %c0_11] : memref<144x32xf32, #tpu.memory_space<vmem>>, vector<1x32xf32>
    %cst_12 = arith.constant dense<0.000000e+00> : vector<128x32xf32>
    %14 = tpu.matmul %11, %12, %cst_12 {dimension_numbers = #tpu.dot_dimension_numbers<[1], [0], [0], [1], [0, 0, 1, 1], [], []>} : vector<128x8xf32>, vector<8x32xf32>, vector<128x32xf32> -> vector<128x32xf32>
    %15 = vector.broadcast %13 : vector<1x32xf32> to vector<128x32xf32>
    %16 = arith.addf %14, %15 : vector<128x32xf32>
    %cst_13 = arith.constant 0.000000e+00 : f32
    %17 = vector.broadcast %cst_13 : f32 to vector<128x32xf32>
    %18 = arith.maximumf %16, %17 : vector<128x32xf32>
    %c104 = arith.constant 104 : index
    %c0_14 = arith.constant 0 : index
    %19 = vector.load %arg3[%c104, %c0_14] : memref<144x32xf32, #tpu.memory_space<vmem>>, vector<32x32xf32>
    %c136 = arith.constant 136 : index
    %c0_15 = arith.constant 0 : index
    %20 = vector.load %arg3[%c136, %c0_15] : memref<144x32xf32, #tpu.memory_space<vmem>>, vector<1x32xf32>
    %cst_16 = arith.constant dense<0.000000e+00> : vector<128x32xf32>
    %21 = tpu.matmul %18, %19, %cst_16 {dimension_numbers = #tpu.dot_dimension_numbers<[1], [0], [0], [1], [0, 0, 1, 1], [], []>} : vector<128x32xf32>, vector<32x32xf32>, vector<128x32xf32> -> vector<128x32xf32>
    %22 = vector.broadcast %20 : vector<1x32xf32> to vector<128x32xf32>
    %23 = arith.addf %21, %22 : vector<128x32xf32>
    %cst_17 = arith.constant dense<0.000000e+00> : vector<1x128xf32>
    %24 = tpu.matmul %10, %23, %cst_17 {dimension_numbers = #tpu.dot_dimension_numbers<[1], [1], [0], [0], [0, 0, 1, 0], [], []>} : vector<1x32xf32>, vector<128x32xf32>, vector<1x128xf32> -> vector<1x128xf32>
    %c0_18 = arith.constant 0 : index
    %25 = memref.load %arg0[%c0_18] : memref<1xi32, #tpu.memory_space<smem>>
    %26 = tpu.iota {dimensions = array<i32: 1>} : vector<1x128xi32>
    %27 = vector.broadcast %25 : i32 to vector<1x128xi32>
    %28 = arith.cmpi slt, %26, %27 : vector<1x128xi32>
    %cst_19 = arith.constant -1.000000e+30 : f32
    %29 = vector.broadcast %cst_19 : f32 to vector<1x128xf32>
    %30 = arith.select %28, %24, %29 : vector<1x128xi1>, vector<1x128xf32>
    %cst_20 = arith.constant dense<0xFF800000> : vector<1xf32>
    %31 = vector.multi_reduction <maximumf>, %30, %cst_20 [1] : vector<1x128xf32> to vector<1xf32>
    %32 = vector.shape_cast %31 : vector<1xf32> to vector<1x1xf32>
    %33 = vector.broadcast %32 : vector<1x1xf32> to vector<1x128xf32>
    %34 = arith.subf %30, %33 : vector<1x128xf32>
    %35 = math.exp %34 : vector<1x128xf32>
    %cst_21 = arith.constant 0.000000e+00 : f32
    %36 = vector.broadcast %cst_21 : f32 to vector<1x128xf32>
    %37 = arith.select %28, %35, %36 : vector<1x128xi1>, vector<1x128xf32>
    %cst_22 = arith.constant dense<0.000000e+00> : vector<1xf32>
    %38 = vector.multi_reduction <add>, %37, %cst_22 [1] : vector<1x128xf32> to vector<1xf32>
    %39 = vector.shape_cast %38 : vector<1xf32> to vector<1x1xf32>
    %40 = vector.broadcast %39 : vector<1x1xf32> to vector<1x128xf32>
    %41 = arith.divf %37, %40 : vector<1x128xf32>
    %c0_23 = arith.constant 0 : index
    %c0_24 = arith.constant 0 : index
    %42 = vector.load %arg4[%c0_23, %c0_24] : memref<1x128xf32, #tpu.memory_space<vmem>>, vector<1x128xf32>
    tpu.vector_store %arg4[%c0_23, %c0_24], %41 {strides = array<i32>} : memref<1x128xf32, #tpu.memory_space<vmem>>, vector<1x128xf32>,
    return
  }
}

</mosaic_0001>

<llo_original>
// kernel: forward.1
$region0: #{forward.1}
  #allocation0 [shape = 'u32[]', space=smem, size = 0x4, offset = 0x4, fixed_abs, tag = 'smem constant byte address 0x4 - core index']
  #allocation1 [shape = 'u32[144,128]{1,0:T(1,128)}', space=vmem, size = 0x12000, scoped, tag = 'internal scratch']
  #allocation2 [shape = 's32[1]{0:T(128)S(6)}', space=smem, size = 0x200, scoped, tag = 'scoped memory for forward.1']
  %s0 = inlined_call_operand.<no memory space> [shape: s32[1], index: 0, kind: input, shape index: {}]
  %s1 = inlined_call_operand.vmem [shape: f32[1,40], index: 1, kind: input, shape index: {}]
  %s2 = inlined_call_operand.vmem [shape: f32[128,8], index: 2, kind: input, shape index: {}]
  %s3 = inlined_call_operand.vmem [shape: f32[144,32], index: 3, kind: input, shape index: {}]
  %s4 = inlined_call_operand.hbm [shape: f32[1,128], index: 4, kind: output, shape index: {}]
  %s5 = sld [smem:[#allocation0]]
  $region26: #{forward.1} parent=0
    _
  %s7 = ssub.s32 1, %s5
  %s8 = scalar_select 0, %s7, %s5
  %9 = sst [smem:[#allocation2]] %s0
  $region1: #{forward.1} parent=0
    #allocation3 [shape = 'u8[512]{0}', space=vmem, size = 0x400, scoped, tag = 'output window, operand 0, single buffered']
    #allocation4 [shape = 's32[1]{0}', space=sflag, size = 0x4, scoped, tag = 'scoped memory for forward.1']
    %10 = vsyncpa [#allocation4], 0
    // Predicated region
    $region2: #{forward.1} parent=1 // pred_check
      _
    $region3: #{forward.1} parent=1 // pred_check_branch
      %12 = sbr.rel (0) target = $region5
    $region4: #{forward.1} parent=1 // pred_region
      _
    $region5: #{forward.1} parent=1 // pred_fallthru
      _
    // Predicated region
    $region6: #{forward.1} parent=1 // pred_check
      _
    $region7: #{forward.1} parent=1 // pred_check_branch
      %14 = sbr.rel (0) target = $region9
    $region8: #{forward.1} parent=1 // pred_region
      _
    $region9: #{forward.1} parent=1 // pred_fallthru
      _
    // Predicated region
    $region10: #{forward.1} parent=1 // pred_check
      _
    $region11: #{forward.1} parent=1 // pred_check_branch
      %16 = sbr.rel (0) target = $region13
    $region12: #{forward.1} parent=1 // pred_region
      _
    $region13: #{forward.1} parent=1 // pred_fallthru
      _
    // Predicated region
    $region14: #{forward.1} parent=1 // pred_check
      _
    $region15: #{forward.1} parent=1 // pred_check_branch
      %18 = sbr.rel (0) target = $region17
    $region16: #{forward.1} parent=1 // pred_region
      _
    $region17: #{forward.1} parent=1 // pred_fallthru
      _
    %v19 = vld [vmem:[%s1] sm:$0x1]
    %v20 = vld [vmem:[%s3] sm:$0xff]
    %v21 = vld [vmem:[%s3 + $0x8] sm:$0xff]
    %v22 = vld [vmem:[%s3 + $0x10] sm:$0xff]
    %v23 = vld [vmem:[%s3 + $0x18] sm:$0xff]
    %v24 = vld [vmem:[%s3 + $0x20] sm:$0xff]
    %v25 = vld [vmem:[%s3 + $0x28] sm:$0x1]
    %vm26 = vcmask 326656
    %v28 = vsel %vm26, %v19, 0
    %30 = vmatprep.subr.mxu0 0.0
    %31 = vmatpush1.msra.mxu0 %v20
    %32 = vmatprep.subr.mxu0 0.0
    %33 = vmatpush1.msra.mxu0 %v21
    %34 = vmatprep.subr.mxu0 0.0
    %35 = vmatpush1.msra.mxu0 %v22
    %36 = vmatprep.subr.mxu0 0.0
    %37 = vmatpush1.msra.mxu0 %v23
    %38 = vmatprep.subr.mxu0 0.0
    %39 = vmatpush1.msra.mxu0 %v24
    %40 = vmatprep.subr.mxu0 0.0
    %41 = vmatpush1.msra.mxu0 0.0
    %42 = vmatprep.subr.mxu0 0.0
    %43 = vmatpush1.msra.mxu0 0.0
    %44 = vmatprep.subr.mxu0 0.0
    %45 = vmatpush1.msra.mxu0 0.0
    %46 = vmatprep.subr.mxu0 0.0
    %47 = vmatpush1.msra.mxu0 0.0
    %48 = vmatprep.subr.mxu0 0.0
    %49 = vmatpush1.msra.mxu0 0.0
    %50 = vmatprep.subr.mxu0 0.0
    %51 = vmatpush1.msra.mxu0 0.0
    %52 = vmatprep.subr.mxu0 0.0
    %53 = vmatpush1.msra.mxu0 0.0
    %54 = vmatprep.subr.mxu0 0.0
    %55 = vmatpush1.msra.mxu0 0.0
    %56 = vmatprep.subr.mxu0 0.0
    %57 = vmatpush1.msra.mxu0 0.0
    %58 = vmatprep.subr.mxu0 0.0
    %59 = vmatpush1.msra.mxu0 0.0
    %60 = vmatprep.subr.mxu0 0.0
    %61 = vmatpush1.msra.mxu0 0.0
    %62 = vmatprep.subr.mxu0 0.0
    %63 = vmatpush1.msra.mxu0 0.0
    %64 = vmatprep.subr.mxu0 0.0
    %65 = vmatpush1.msra.mxu0 0.0
    %66 = vmatprep.subr.mxu0 0.0
    %67 = vmatpush1.msra.mxu0 0.0
    %68 = vmatprep.subr.mxu0 0.0
    %69 = vmatpush1.msra.mxu0 0.0
    %70 = vmatprep.subr.mxu0 0.0
    %71 = vmatpush1.msra.mxu0 0.0
    %72 = vmatprep.subr.mxu0 0.0
    %73 = vmatpush1.msra.mxu0 0.0
    %74 = vmatprep.subr.mxu0 0.0
    %75 = vmatpush1.msra.mxu0 0.0
    %76 = vmatprep.subr.mxu0 0.0
    %77 = vmatpush1.msra.mxu0 0.0
    %78 = vmatprep.subr.mxu0 0.0
    %79 = vmatpush1.msra.mxu0 0.0
    %80 = vmatprep.subr.mxu0 0.0
    %81 = vmatpush1.msra.mxu0 0.0
    %82 = vmatprep.subr.mxu0 0.0
    %83 = vmatpush1.msra.mxu0 0.0
    %84 = vmatprep.subr.mxu0 0.0
    %85 = vmatpush1.msra.mxu0 0.0
    %86 = vmatprep.subr.mxu0 0.0
    %87 = vmatpush1.msra.mxu0 0.0
    %88 = vmatprep.subr.mxu0 0.0
    %89 = vmatpush1.msra.mxu0 0.0
    %90 = vmatprep.subr.mxu0 0.0
    %91 = vmatpush1.msra.mxu0 0.0
    %92 = vmatprep.subr.mxu0 0.0
    %93 = vmatpush1.msra.mxu0 0.0
    %94 = vmatprep.mubr.f32.mxu0 0.0
    %95 = vmatmul.mubr.f32.gmra.mrb[0].mxu0 %v28
    %v96 = vpop.f32.mrb[0].mxu0
    %v97 = vadd.f32 %v25, %v96
    %v98 = vpop.f32.mrb[0].mxu0
    %99 = vdwg.mxu0
    %v100 = vmax.f32 %v97, 0.0
    %v101 = vld [vmem:[%s3 + $0x30] sm:$0xff]
    %v102 = vld [vmem:[%s3 + $0x38] sm:$0xff]
    %v103 = vld [vmem:[%s3 + $0x40] sm:$0xff]
    %v104 = vld [vmem:[%s3 + $0x48] sm:$0xff]
    %v105 = vld [vmem:[%s3 + $0x50] sm:$0x1]
    %vm106 = vcmask 261120
    %v108 = vsel %vm106, %v100, 0
    %110 = vmatprep.subr.mxu0 0.0
    %111 = vmatpush1.msra.mxu0 %v101
    %112 = vmatprep.subr.mxu0 0.0
    %113 = vmatpush1.msra.mxu0 %v102
    %114 = vmatprep.subr.mxu0 0.0
    %115 = vmatpush1.msra.mxu0 %v103
    %116 = vmatprep.subr.mxu0 0.0
    %117 = vmatpush1.msra.mxu0 %v104
    %118 = vmatprep.subr.mxu0 0.0
    %119 = vmatpush1.msra.mxu0 0.0
    %120 = vmatprep.subr.mxu0 0.0
    %121 = vmatpush1.msra.mxu0 0.0
    %122 = vmatprep.subr.mxu0 0.0
    %123 = vmatpush1.msra.mxu0 0.0
    %124 = vmatprep.subr.mxu0 0.0
    %125 = vmatpush1.msra.mxu0 0.0
    %126 = vmatprep.subr.mxu0 0.0
    %127 = vmatpush1.msra.mxu0 0.0
    %128 = vmatprep.subr.mxu0 0.0
    %129 = vmatpush1.msra.mxu0 0.0
    %130 = vmatprep.subr.mxu0 0.0
    %131 = vmatpush1.msra.mxu0 0.0
    %132 = vmatprep.subr.mxu0 0.0
    %133 = vmatpush1.msra.mxu0 0.0
    %134 = vmatprep.subr.mxu0 0.0
    %135 = vmatpush1.msra.mxu0 0.0
    %136 = vmatprep.subr.mxu0 0.0
    %137 = vmatpush1.msra.mxu0 0.0
    %138 = vmatprep.subr.mxu0 0.0
    %139 = vmatpush1.msra.mxu0 0.0
    %140 = vmatprep.subr.mxu0 0.0
    %141 = vmatpush1.msra.mxu0 0.0
    %142 = vmatprep.subr.mxu0 0.0
    %143 = vmatpush1.msra.mxu0 0.0
    %144 = vmatprep.subr.mxu0 0.0
    %145 = vmatpush1.msra.mxu0 0.0
    %146 = vmatprep.subr.mxu0 0.0
    %147 = vmatpush1.msra.mxu0 0.0
    %148 = vmatprep.subr.mxu0 0.0
    %149 = vmatpush1.msra.mxu0 0.0
    %150 = vmatprep.subr.mxu0 0.0
    %151 = vmatpush1.msra.mxu0 0.0
    %152 = vmatprep.subr.mxu0 0.0
    %153 = vmatpush1.msra.mxu0 0.0
    %154 = vmatprep.subr.mxu0 0.0
    %155 = vmatpush1.msra.mxu0 0.0
    %156 = vmatprep.subr.mxu0 0.0
    %157 = vmatpush1.msra.mxu0 0.0
    %158 = vmatprep.subr.mxu0 0.0
    %159 = vmatpush1.msra.mxu0 0.0
    %160 = vmatprep.subr.mxu0 0.0
    %161 = vmatpush1.msra.mxu0 0.0
    %162 = vmatprep.subr.mxu0 0.0
    %163 = vmatpush1.msra.mxu0 0.0
    %164 = vmatprep.subr.mxu0 0.0
    %165 = vmatpush1.msra.mxu0 0.0
    %166 = vmatprep.subr.mxu0 0.0
    %167 = vmatpush1.msra.mxu0 0.0
    %168 = vmatprep.subr.mxu0 0.0
    %169 = vmatpush1.msra.mxu0 0.0
    %170 = vmatprep.subr.mxu0 0.0
    %171 = vmatpush1.msra.mxu0 0.0
    %172 = vmatprep.subr.mxu0 0.0
    %173 = vmatpush1.msra.mxu0 0.0
    %174 = vmatprep.mubr.f32.mxu0 0.0
    %175 = vmatmul.mubr.f32.gmra.mrb[0].mxu0 %v108
    %v176 = vpop.f32.mrb[0].mxu0
    %v177 = vadd.f32 %v105, %v176
    %v178 = vpop.f32.mrb[0].mxu0
    %179 = vdwg.mxu0
    %v180 = vld [vmem:[%s2] sm:$0xff]
    %v181 = vld [vmem:[%s2 + $0x8] sm:$0xff]
    %v182 = vld [vmem:[%s2 + $0x10] sm:$0xff]
    %v183 = vld [vmem:[%s2 + $0x18] sm:$0xff]
    %v184 = vld [vmem:[%s2 + $0x20] sm:$0xff]
    %v185 = vld [vmem:[%s2 + $0x28] sm:$0xff]
    %v186 = vld [vmem:[%s2 + $0x30] sm:$0xff]
    %v187 = vld [vmem:[%s2 + $0x38] sm:$0xff]
    %v188 = vld [vmem:[%s2 + $0x40] sm:$0xff]
    %v189 = vld [vmem:[%s2 + $0x48] sm:$0xff]
    %v190 = vld [vmem:[%s2 + $0x50] sm:$0xff]
    %v191 = vld [vmem:[%s2 + $0x58] sm:$0xff]
    %v192 = vld [vmem:[%s2 + $0x60] sm:$0xff]
    %v193 = vld [vmem:[%s2 + $0x68] sm:$0xff]
    %v194 = vld [vmem:[%s2 + $0x70] sm:$0xff]
    %v195 = vld [vmem:[%s2 + $0x78] sm:$0xff]
    %v196 = vld [vmem:[%s3 + $0x58] sm:$0xff]
    %v197 = vld [vmem:[%s3 + $0x60] sm:$0x1]
    %v198 = vlaneseq
    %v199 = vshrl.u32 %v198, 7
    %v200 = vsub.s32 0, %v199
    %v201 = vrot.slane %v197, %v200
    %vm202 = vcmask 64512
    %v204 = vsel %vm202, %v180, 0
    %v207 = vsel %vm202, %v181, 0
    %v210 = vsel %vm202, %v182, 0
    %v213 = vsel %vm202, %v183, 0
    %v216 = vsel %vm202, %v184, 0
    %v219 = vsel %vm202, %v185, 0
    %v222 = vsel %vm202, %v186, 0
    %v225 = vsel %vm202, %v187, 0
    %v228 = vsel %vm202, %v188, 0
    %v231 = vsel %vm202, %v189, 0
    %v234 = vsel %vm202, %v190, 0
    %v237 = vsel %vm202, %v191, 0
    %v240 = vsel %vm202, %v192, 0
    %v243 = vsel %vm202, %v193, 0
    %v246 = vsel %vm202, %v194, 0
    %v249 = vsel %vm202, %v195, 0
    %251 = vmatprep.subr.mxu0 0.0
    %252 = vmatpush1.msra.mxu0 %v196
    %253 = vmatprep.subr.mxu0 0.0
    %254 = vmatpush1.msra.mxu0 0.0
    %255 = vmatprep.subr.mxu0 0.0
    %256 = vmatpush1.msra.mxu0 0.0
    %257 = vmatprep.subr.mxu0 0.0
    %258 = vmatpush1.msra.mxu0 0.0
    %259 = vmatprep.subr.mxu0 0.0
    %260 = vmatpush1.msra.mxu0 0.0
    %261 = vmatprep.subr.mxu0 0.0
    %262 = vmatpush1.msra.mxu0 0.0
    %263 = vmatprep.subr.mxu0 0.0
    %264 = vmatpush1.msra.mxu0 0.0
    %265 = vmatprep.subr.mxu0 0.0
    %266 = vmatpush1.msra.mxu0 0.0
    %267 = vmatprep.subr.mxu0 0.0
    %268 = vmatpush1.msra.mxu0 0.0
    %269 = vmatprep.subr.mxu0 0.0
    %270 = vmatpush1.msra.mxu0 0.0
    %271 = vmatprep.subr.mxu0 0.0
    %272 = vmatpush1.msra.mxu0 0.0
    %273 = vmatprep.subr.mxu0 0.0
    %274 = vmatpush1.msra.mxu0 0.0
    %275 = vmatprep.subr.mxu0 0.0
    %276 = vmatpush1.msra.mxu0 0.0
    %277 = vmatprep.subr.mxu0 0.0
    %278 = vmatpush1.msra.mxu0 0.0
    %279 = vmatprep.subr.mxu0 0.0
    %280 = vmatpush1.msra.mxu0 0.0
    %281 = vmatprep.subr.mxu0 0.0
    %282 = vmatpush1.msra.mxu0 0.0
    %283 = vmatprep.subr.mxu0 0.0
    %284 = vmatpush1.msra.mxu0 0.0
    %285 = vmatprep.subr.mxu0 0.0
    %286 = vmatpush1.msra.mxu0 0.0
    %287 = vmatprep.subr.mxu0 0.0
    %288 = vmatpush1.msra.mxu0 0.0
    %289 = vmatprep.subr.mxu0 0.0
    %290 = vmatpush1.msra.mxu0 0.0
    %291 = vmatprep.subr.mxu0 0.0
    %292 = vmatpush1.msra.mxu0 0.0
    %293 = vmatprep.subr.mxu0 0.0
    %294 = vmatpush1.msra.mxu0 0.0
    %295 = vmatprep.subr.mxu0 0.0
    %296 = vmatpush1.msra.mxu0 0.0
    %297 = vmatprep.subr.mxu0 0.0
    %298 = vmatpush1.msra.mxu0 0.0
    %299 = vmatprep.subr.mxu0 0.0
    %300 = vmatpush1.msra.mxu0 0.0
    %301 = vmatprep.subr.mxu0 0.0
    %302 = vmatpush1.msra.mxu0 0.0
    %303 = vmatprep.subr.mxu0 0.0
    %304 = vmatpush1.msra.mxu0 0.0
    %305 = vmatprep.subr.mxu0 0.0
    %306 = vmatpush1.msra.mxu0 0.0
    %307 = vmatprep.subr.mxu0 0.0
    %308 = vmatpush1.msra.mxu0 0.0
    %309 = vmatprep.subr.mxu0 0.0
    %310 = vmatpush1.msra.mxu0 0.0
    %311 = vmatprep.subr.mxu0 0.0
    %312 = vmatpush1.msra.mxu0 0.0
    %313 = vmatprep.subr.mxu0 0.0
    %314 = vmatpush1.msra.mxu0 0.0
    %315 = vmatprep.mubr.f32.mxu0 0.0
    %316 = vmatmul.mubr.f32.gmra.mrb[0].mxu0 %v204
    %v317 = vpop.f32.mrb[0].mxu0
    %v318 = vadd.f32 %v201, %v317
    %v319 = vpop.f32.mrb[0].mxu0
    %320 = vmatprep.mubr.f32.mxu0 0.0
    %321 = vmatmul.mubr.f32.gmra.mrb[0].mxu0 %v207
    %v322 = vpop.f32.mrb[0].mxu0
    %v323 = vadd.f32 %v201, %v322
    %v324 = vpop.f32.mrb[0].mxu0
    %325 = vmatprep.mubr.f32.mxu0 0.0
    %326 = vmatmul.mubr.f32.gmra.mrb[0].mxu0 %v210
    %v327 = vpop.f32.mrb[0].mxu0
    %v328 = vadd.f32 %v201, %v327
    %v329 = vpop.f32.mrb[0].mxu0
    %330 = vmatprep.mubr.f32.mxu0 0.0
    %331 = vmatmul.mubr.f32.gmra.mrb[0].mxu0 %v213
    %v332 = vpop.f32.mrb[0].mxu0
    %v333 = vadd.f32 %v201, %v332
    %v334 = vpop.f32.mrb[0].mxu0
    %335 = vmatprep.mubr.f32.mxu0 0.0
    %336 = vmatmul.mubr.f32.gmra.mrb[0].mxu0 %v216
    %v337 = vpop.f32.mrb[0].mxu0
    %v338 = vadd.f32 %v201, %v337
    %v339 = vpop.f32.mrb[0].mxu0
    %340 = vmatprep.mubr.f32.mxu0 0.0
    %341 = vmatmul.mubr.f32.gmra.mrb[0].mxu0 %v219
    %v342 = vpop.f32.mrb[0].mxu0
    %v343 = vadd.f32 %v201, %v342
    %v344 = vpop.f32.mrb[0].mxu0
    %345 = vmatprep.mubr.f32.mxu0 0.0
    %346 = vmatmul.mubr.f32.gmra.mrb[0].mxu0 %v222
    %v347 = vpop.f32.mrb[0].mxu0
    %v348 = vadd.f32 %v201, %v347
    %v349 = vpop.f32.mrb[0].mxu0
    %350 = vmatprep.mubr.f32.mxu0 0.0
    %351 = vmatmul.mubr.f32.gmra.mrb[0].mxu0 %v225
    %v352 = vpop.f32.mrb[0].mxu0
    %v353 = vadd.f32 %v201, %v352
    %v354 = vpop.f32.mrb[0].mxu0
    %355 = vmatprep.mubr.f32.mxu0 0.0
    %356 = vmatmul.mubr.f32.gmra.mrb[0].mxu0 %v228
    %v357 = vpop.f32.mrb[0].mxu0
    %v358 = vadd.f32 %v201, %v357
    %v359 = vpop.f32.mrb[0].mxu0
    %360 = vmatprep.mubr.f32.mxu0 0.0
    %361 = vmatmul.mubr.f32.gmra.mrb[0].mxu0 %v231
    %v362 = vpop.f32.mrb[0].mxu0
    %v363 = vadd.f32 %v201, %v362
    %v364 = vpop.f32.mrb[0].mxu0
    %365 = vmatprep.mubr.f32.mxu0 0.0
    %366 = vmatmul.mubr.f32.gmra.mrb[0].mxu0 %v234
    %v367 = vpop.f32.mrb[0].mxu0
    %v368 = vadd.f32 %v201, %v367
    %v369 = vpop.f32.mrb[0].mxu0
    %370 = vmatprep.mubr.f32.mxu0 0.0
    %371 = vmatmul.mubr.f32.gmra.mrb[0].mxu0 %v237
    %v372 = vpop.f32.mrb[0].mxu0
    %v373 = vadd.f32 %v201, %v372
    %v374 = vpop.f32.mrb[0].mxu0
    %375 = vmatprep.mubr.f32.mxu0 0.0
    %376 = vmatmul.mubr.f32.gmra.mrb[0].mxu0 %v240
    %v377 = vpop.f32.mrb[0].mxu0
    %v378 = vadd.f32 %v201, %v377
    %v379 = vpop.f32.mrb[0].mxu0
    %380 = vmatprep.mubr.f32.mxu0 0.0
    %381 = vmatmul.mubr.f32.gmra.mrb[0].mxu0 %v243
    %v382 = vpop.f32.mrb[0].mxu0
    %v383 = vadd.f32 %v201, %v382
    %v384 = vpop.f32.mrb[0].mxu0
    %385 = vmatprep.mubr.f32.mxu0 0.0
    %386 = vmatmul.mubr.f32.gmra.mrb[0].mxu0 %v246
    %v387 = vpop.f32.mrb[0].mxu0
    %v388 = vadd.f32 %v201, %v387
    %v389 = vpop.f32.mrb[0].mxu0
    %390 = vmatprep.mubr.f32.mxu0 0.0
    %391 = vmatmul.mubr.f32.gmra.mrb[0].mxu0 %v249
    %v392 = vpop.f32.mrb[0].mxu0
    %v393 = vadd.f32 %v201, %v392
    %v394 = vpop.f32.mrb[0].mxu0
    %395 = vdwg.mxu0
    %v396 = vmax.f32 %v318, 0.0
    %v397 = vmax.f32 %v323, 0.0
    %v398 = vmax.f32 %v328, 0.0
    %v399 = vmax.f32 %v333, 0.0
    %v400 = vmax.f32 %v338, 0.0
    %v401 = vmax.f32 %v343, 0.0
    %v402 = vmax.f32 %v348, 0.0
    %v403 = vmax.f32 %v353, 0.0
    %v404 = vmax.f32 %v358, 0.0
    %v405 = vmax.f32 %v363, 0.0
    %v406 = vmax.f32 %v368, 0.0
    %v407 = vmax.f32 %v373, 0.0
    %v408 = vmax.f32 %v378, 0.0
    %v409 = vmax.f32 %v383, 0.0
    %v410 = vmax.f32 %v388, 0.0
    %v411 = vmax.f32 %v393, 0.0
    %v412 = vld [vmem:[%s3 + $0x68] sm:$0xff]
    %v413 = vld [vmem:[%s3 + $0x70] sm:$0xff]
    %v414 = vld [vmem:[%s3 + $0x78] sm:$0xff]
    %v415 = vld [vmem:[%s3 + $0x80] sm:$0xff]
    %v416 = vld [vmem:[%s3 + $0x88] sm:$0x1]
    %v417 = vlaneseq
    %v418 = vshrl.u32 %v417, 7
    %v419 = vsub.s32 0, %v418
    %v420 = vrot.slane %v416, %v419
    %v422 = vsel %vm106, %v396, 0
    %v425 = vsel %vm106, %v397, 0
    %v428 = vsel %vm106, %v398, 0
    %v431 = vsel %vm106, %v399, 0
    %v434 = vsel %vm106, %v400, 0
    %v437 = vsel %vm106, %v401, 0
    %v440 = vsel %vm106, %v402, 0
    %v443 = vsel %vm106, %v403, 0
    %v446 = vsel %vm106, %v404, 0
    %v449 = vsel %vm106, %v405, 0
    %v452 = vsel %vm106, %v406, 0
    %v455 = vsel %vm106, %v407, 0
    %v458 = vsel %vm106, %v408, 0
    %v461 = vsel %vm106, %v409, 0
    %v464 = vsel %vm106, %v410, 0
    %v467 = vsel %vm106, %v411, 0
    %469 = vmatprep.subr.mxu0 0.0
    %470 = vmatpush1.msra.mxu0 %v412
    %471 = vmatprep.subr.mxu0 0.0
    %472 = vmatpush1.msra.mxu0 %v413
    %473 = vmatprep.subr.mxu0 0.0
    %474 = vmatpush1.msra.mxu0 %v414
    %475 = vmatprep.subr.mxu0 0.0
    %476 = vmatpush1.msra.mxu0 %v415
    %477 = vmatprep.subr.mxu0 0.0
    %478 = vmatpush1.msra.mxu0 0.0
    %479 = vmatprep.subr.mxu0 0.0
    %480 = vmatpush1.msra.mxu0 0.0
    %481 = vmatprep.subr.mxu0 0.0
    %482 = vmatpush1.msra.mxu0 0.0
    %483 = vmatprep.subr.mxu0 0.0
    %484 = vmatpush1.msra.mxu0 0.0
    %485 = vmatprep.subr.mxu0 0.0
    %486 = vmatpush1.msra.mxu0 0.0
    %487 = vmatprep.subr.mxu0 0.0
    %488 = vmatpush1.msra.mxu0 0.0
    %489 = vmatprep.subr.mxu0 0.0
    %490 = vmatpush1.msra.mxu0 0.0
    %491 = vmatprep.subr.mxu0 0.0
    %492 = vmatpush1.msra.mxu0 0.0
    %493 = vmatprep.subr.mxu0 0.0
    %494 = vmatpush1.msra.mxu0 0.0
    %495 = vmatprep.subr.mxu0 0.0
    %496 = vmatpush1.msra.mxu0 0.0
    %497 = vmatprep.subr.mxu0 0.0
    %498 = vmatpush1.msra.mxu0 0.0
    %499 = vmatprep.subr.mxu0 0.0
    %500 = vmatpush1.msra.mxu0 0.0
    %501 = vmatprep.subr.mxu0 0.0
    %502 = vmatpush1.msra.mxu0 0.0
    %503 = vmatprep.subr.mxu0 0.0
    %504 = vmatpush1.msra.mxu0 0.0
    %505 = vmatprep.subr.mxu0 0.0
    %506 = vmatpush1.msra.mxu0 0.0
    %507 = vmatprep.subr.mxu0 0.0
    %508 = vmatpush1.msra.mxu0 0.0
    %509 = vmatprep.subr.mxu0 0.0
    %510 = vmatpush1.msra.mxu0 0.0
    %511 = vmatprep.subr.mxu0 0.0
    %512 = vmatpush1.msra.mxu0 0.0
    %513 = vmatprep.subr.mxu0 0.0
    %514 = vmatpush1.msra.mxu0 0.0
    %515 = vmatprep.subr.mxu0 0.0
    %516 = vmatpush1.msra.mxu0 0.0
    %517 = vmatprep.subr.mxu0 0.0
    %518 = vmatpush1.msra.mxu0 0.0
    %519 = vmatprep.subr.mxu0 0.0
    %520 = vmatpush1.msra.mxu0 0.0
    %521 = vmatprep.subr.mxu0 0.0
    %522 = vmatpush1.msra.mxu0 0.0
    %523 = vmatprep.subr.mxu0 0.0
    %524 = vmatpush1.msra.mxu0 0.0
    %525 = vmatprep.subr.mxu0 0.0
    %526 = vmatpush1.msra.mxu0 0.0
    %527 = vmatprep.subr.mxu0 0.0
    %528 = vmatpush1.msra.mxu0 0.0
    %529 = vmatprep.subr.mxu0 0.0
    %530 = vmatpush1.msra.mxu0 0.0
    %531 = vmatprep.subr.mxu0 0.0
    %532 = vmatpush1.msra.mxu0 0.0
    %533 = vmatprep.mubr.f32.mxu0 0.0
    %534 = vmatmul.mubr.f32.gmra.mrb[0].mxu0 %v422
    %v535 = vpop.f32.mrb[0].mxu0
    %v536 = vadd.f32 %v420, %v535
    %v537 = vpop.f32.mrb[0].mxu0
    %538 = vmatprep.mubr.f32.mxu0 0.0
    %539 = vmatmul.mubr.f32.gmra.mrb[0].mxu0 %v425
    %v540 = vpop.f32.mrb[0].mxu0
    %v541 = vadd.f32 %v420, %v540
    %v542 = vpop.f32.mrb[0].mxu0
    %543 = vmatprep.mubr.f32.mxu0 0.0
    %544 = vmatmul.mubr.f32.gmra.mrb[0].mxu0 %v428
    %v545 = vpop.f32.mrb[0].mxu0
    %v546 = vadd.f32 %v420, %v545
    %v547 = vpop.f32.mrb[0].mxu0
    %548 = vmatprep.mubr.f32.mxu0 0.0
    %549 = vmatmul.mubr.f32.gmra.mrb[0].mxu0 %v431
    %v550 = vpop.f32.mrb[0].mxu0
    %v551 = vadd.f32 %v420, %v550
    %v552 = vpop.f32.mrb[0].mxu0
    %553 = vmatprep.mubr.f32.mxu0 0.0
    %554 = vmatmul.mubr.f32.gmra.mrb[0].mxu0 %v434
    %v555 = vpop.f32.mrb[0].mxu0
    %v556 = vadd.f32 %v420, %v555
    %v557 = vpop.f32.mrb[0].mxu0
    %558 = vmatprep.mubr.f32.mxu0 0.0
    %559 = vmatmul.mubr.f32.gmra.mrb[0].mxu0 %v437
    %v560 = vpop.f32.mrb[0].mxu0
    %v561 = vadd.f32 %v420, %v560
    %v562 = vpop.f32.mrb[0].mxu0
    %563 = vmatprep.mubr.f32.mxu0 0.0
    %564 = vmatmul.mubr.f32.gmra.mrb[0].mxu0 %v440
    %v565 = vpop.f32.mrb[0].mxu0
    %v566 = vadd.f32 %v420, %v565
    %v567 = vpop.f32.mrb[0].mxu0
    %568 = vmatprep.mubr.f32.mxu0 0.0
    %569 = vmatmul.mubr.f32.gmra.mrb[0].mxu0 %v443
    %v570 = vpop.f32.mrb[0].mxu0
    %v571 = vadd.f32 %v420, %v570
    %v572 = vpop.f32.mrb[0].mxu0
    %573 = vmatprep.mubr.f32.mxu0 0.0
    %574 = vmatmul.mubr.f32.gmra.mrb[0].mxu0 %v446
    %v575 = vpop.f32.mrb[0].mxu0
    %v576 = vadd.f32 %v420, %v575
    %v577 = vpop.f32.mrb[0].mxu0
    %578 = vmatprep.mubr.f32.mxu0 0.0
    %579 = vmatmul.mubr.f32.gmra.mrb[0].mxu0 %v449
    %v580 = vpop.f32.mrb[0].mxu0
    %v581 = vadd.f32 %v420, %v580
    %v582 = vpop.f32.mrb[0].mxu0
    %583 = vmatprep.mubr.f32.mxu0 0.0
    %584 = vmatmul.mubr.f32.gmra.mrb[0].mxu0 %v452
    %v585 = vpop.f32.mrb[0].mxu0
    %v586 = vadd.f32 %v420, %v585
    %v587 = vpop.f32.mrb[0].mxu0
    %588 = vmatprep.mubr.f32.mxu0 0.0
    %589 = vmatmul.mubr.f32.gmra.mrb[0].mxu0 %v455
    %v590 = vpop.f32.mrb[0].mxu0
    %v591 = vadd.f32 %v420, %v590
    %v592 = vpop.f32.mrb[0].mxu0
    %593 = vmatprep.mubr.f32.mxu0 0.0
    %594 = vmatmul.mubr.f32.gmra.mrb[0].mxu0 %v458
    %v595 = vpop.f32.mrb[0].mxu0
    %v596 = vadd.f32 %v420, %v595
    %v597 = vpop.f32.mrb[0].mxu0
    %598 = vmatprep.mubr.f32.mxu0 0.0
    %599 = vmatmul.mubr.f32.gmra.mrb[0].mxu0 %v461
    %v600 = vpop.f32.mrb[0].mxu0
    %v601 = vadd.f32 %v420, %v600
    %v602 = vpop.f32.mrb[0].mxu0
    %603 = vmatprep.mubr.f32.mxu0 0.0
    %604 = vmatmul.mubr.f32.gmra.mrb[0].mxu0 %v464
    %v605 = vpop.f32.mrb[0].mxu0
    %v606 = vadd.f32 %v420, %v605
    %v607 = vpop.f32.mrb[0].mxu0
    %608 = vmatprep.mubr.f32.mxu0 0.0
    %609 = vmatmul.mubr.f32.gmra.mrb[0].mxu0 %v467
    %v610 = vpop.f32.mrb[0].mxu0
    %v611 = vadd.f32 %v420, %v610
    %v612 = vpop.f32.mrb[0].mxu0
    %613 = vdwg.mxu0
    %v615 = vsel %vm106, %v177, 0
    %v618 = vsel %vm106, %v536, 0
    %v621 = vsel %vm106, %v541, 0
    %v624 = vsel %vm106, %v546, 0
    %v627 = vsel %vm106, %v551, 0
    %v630 = vsel %vm106, %v556, 0
    %v633 = vsel %vm106, %v561, 0
    %v636 = vsel %vm106, %v566, 0
    %v639 = vsel %vm106, %v571, 0
    %v642 = vsel %vm106, %v576, 0
    %v645 = vsel %vm106, %v581, 0
    %v648 = vsel %vm106, %v586, 0
    %v651 = vsel %vm106, %v591, 0
    %v654 = vsel %vm106, %v596, 0
    %v657 = vsel %vm106, %v601, 0
    %v660 = vsel %vm106, %v606, 0
    %v663 = vsel %vm106, %v611, 0
    %665 = vmatprep.subr.mxu0 0.0
    %666 = vmatpush1.xpose.msra.mxu0 %v618
    %667 = vmatprep.subr.mxu0 0.0
    %668 = vmatpush1.xpose.msra.mxu0 %v621
    %669 = vmatprep.subr.mxu0 0.0
    %670 = vmatpush1.xpose.msra.mxu0 %v624
    %671 = vmatprep.subr.mxu0 0.0
    %672 = vmatpush1.xpose.msra.mxu0 %v627
    %673 = vmatprep.subr.mxu0 0.0
    %674 = vmatpush1.xpose.msra.mxu0 %v630
    %675 = vmatprep.subr.mxu0 0.0
    %676 = vmatpush1.xpose.msra.mxu0 %v633
    %677 = vmatprep.subr.mxu0 0.0
    %678 = vmatpush1.xpose.msra.mxu0 %v636
    %679 = vmatprep.subr.mxu0 0.0
    %680 = vmatpush1.xpose.msra.mxu0 %v639
    %681 = vmatprep.subr.mxu0 0.0
    %682 = vmatpush1.xpose.msra.mxu0 %v642
    %683 = vmatprep.subr.mxu0 0.0
    %684 = vmatpush1.xpose.msra.mxu0 %v645
    %685 = vmatprep.subr.mxu0 0.0
    %686 = vmatpush1.xpose.msra.mxu0 %v648
    %687 = vmatprep.subr.mxu0 0.0
    %688 = vmatpush1.xpose.msra.mxu0 %v651
    %689 = vmatprep.subr.mxu0 0.0
    %690 = vmatpush1.xpose.msra.mxu0 %v654
    %691 = vmatprep.subr.mxu0 0.0
    %692 = vmatpush1.xpose.msra.mxu0 %v657
    %693 = vmatprep.subr.mxu0 0.0
    %694 = vmatpush1.xpose.msra.mxu0 %v660
    %695 = vmatprep.subr.mxu0 0.0
    %696 = vmatpush1.xpose.msra.mxu0 %v663
    %697 = vmatprep.subr.mxu0 0.0
    %698 = vmatpush1.xpose.msra.mxu0 0.0
    %699 = vmatprep.subr.mxu0 0.0
    %700 = vmatpush1.xpose.msra.mxu0 0.0
    %701 = vmatprep.subr.mxu0 0.0
    %702 = vmatpush1.xpose.msra.mxu0 0.0
    %703 = vmatprep.subr.mxu0 0.0
    %704 = vmatpush1.xpose.msra.mxu0 0.0
    %705 = vmatprep.subr.mxu0 0.0
    %706 = vmatpush1.xpose.msra.mxu0 0.0
    %707 = vmatprep.subr.mxu0 0.0
    %708 = vmatpush1.xpose.msra.mxu0 0.0
    %709 = vmatprep.subr.mxu0 0.0
    %710 = vmatpush1.xpose.msra.mxu0 0.0
    %711 = vmatprep.subr.mxu0 0.0
    %712 = vmatpush1.xpose.msra.mxu0 0.0
    %713 = vmatprep.subr.mxu0 0.0
    %714 = vmatpush1.xpose.msra.mxu0 0.0
    %715 = vmatprep.subr.mxu0 0.0
    %716 = vmatpush1.xpose.msra.mxu0 0.0
    %717 = vmatprep.subr.mxu0 0.0
    %718 = vmatpush1.xpose.msra.mxu0 0.0
    %719 = vmatprep.subr.mxu0 0.0
    %720 = vmatpush1.xpose.msra.mxu0 0.0
    %721 = vmatprep.subr.mxu0 0.0
    %722 = vmatpush1.xpose.msra.mxu0 0.0
    %723 = vmatprep.subr.mxu0 0.0
    %724 = vmatpush1.xpose.msra.mxu0 0.0
    %725 = vmatprep.subr.mxu0 0.0
    %726 = vmatpush1.xpose.msra.mxu0 0.0
    %727 = vmatprep.subr.mxu0 0.0
    %728 = vmatpush1.xpose.msra.mxu0 0.0
    %729 = vmatprep.mubr.f32.mxu0 0.0
    %730 = vmatmul.mubr.f32.gmra.mrb[0].mxu0 %v615
    %v731 = vpop.f32.mrb[0].mxu0
    %v732 = vadd.f32 0.0, %v731
    %v733 = vpop.f32.mrb[0].mxu0
    %734 = vdwg.mxu0
    %s735 = sld [smem:[#allocation2]]
    %v736 = vlaneseq
    %v737 = vand.u32 %v736, 127
    %v738 = vstv %s735
    %vm739 = vcmp.lt.s32.totalorder %v737, %v738
    %v740 = vsel %vm739, %v732, -1e+30
    %vm741 = vcmask 1040384
    %v742 = vsel %vm741, %v740, -inf
    %743 = vmax.xlane.f32.xlu0 %v742
    %v744 = vpop.xlane.xlu0 %743
    %v745 = vsub.f32 %v740, %v744
    %v746 = vmul.f32 %v745, 1.442695
    %v747 = vpow.pop %v746
    %v748 = vsel %vm739, %v747, 0.0
    %v749 = vsel %vm741, %v748, 0.0
    %750 = vadd.xlane.f32.xlu0 %v749
    %v751 = vpop.xlane.xlu0 %750
    %v752 = vrcp.pop %v751
    %v753 = vmul.f32 %v748, %v752
    %754 = vst [vmem:[#allocation3] sm:$0x1] %v753
    // Predicated region
    $region18: #{forward.1} parent=1 // pred_check
      _
    $region19: #{forward.1} parent=1 // pred_check_branch
      %756 = sbr.rel (0) target = $region21
    $region20: #{forward.1} parent=1 // pred_region
      %s758 = ssub.s32 16, 16
      %759 = vsyncadd [#allocation4], %s758
      %s761 = sshll.u32 [#allocation3], 4
      %s762 = int_to_ptr.vmem [resolvable:$true] %s761
      %764 = dma.vmem_to_hbm [thread:$0]  %s762, 16, %s4, [#allocation4]
    $region21: #{forward.1} parent=1 // pred_fallthru
      _
    // Predicated region
    $region22: #{forward.1} parent=1 // pred_check
      _
    $region23: #{forward.1} parent=1 // pred_check_branch
      %766 = sbr.rel (0) target = $region25
    $region24: #{forward.1} parent=1 // pred_region
      %767 = dma.done [#allocation4], 16
    $region25: #{forward.1} parent=1 // pred_fallthru
      _
    %768 = vsyncpa [#allocation4], 1

</llo_original>
